<compile_context>
chip_gen: v5e
topology: v5e:2x2
jax: 0.10.0
libtpu: 0.0.40
codegen_flags: <defaults>
</compile_context>

<pallas_src>
import jax
import jax.numpy as jnp
from jax.experimental import pallas as pl
from jax.experimental.pallas import tpu as pltpu

ALPHA = 0.5        # config['alpha']
BETA = 0.1         # config['beta']
IGNORE_INDEX = -100


# ---------------------------------------------------------------------------
# Hardware-aware sizing helpers.
# ---------------------------------------------------------------------------
def _vmem_budget_bytes():
    """~80% of physical VMEM, capped at 112 MiB (v7x: 64 MiB, v5e/v6e: 128 MiB)."""
    phys = 64 * 1024 * 1024                      # conservative default (v7x)
    try:
        cap = int(getattr(pltpu.get_tpu_info(), "vmem_capacity_bytes", 0) or 0)
        if cap > 0:
            phys = cap
    except Exception:
        pass
    return min(int(phys * 0.8), 112 * 1024 * 1024)


def _tensorcores_per_chip():
    try:
        kind = jax.devices()[0].device_kind.lower()
        if "v7" in kind:
            return 2
    except Exception:
        pass
    return 1


def _vmem_usage_bytes(nbS, D, M, tile_v, nb):
    """Explicit VMEM estimate for one example block / vocab tile (review item 2)."""
    bf16, f32, lane = 2, 4, 128
    u = 0
    u += 2 * nbS * D * bf16                    # hidden input (double buffered)
    u += 2 * nbS * D * bf16                    # wv_ans input (double buffered)
    u += 2 * M * D * bf16                      # knowledge (double buffered)
    u += 2 * 2 * nbS * lane * f32              # valid + b_ans (lane padded, x2 buf)
    u += 2 * max(nb, 8) * max(M, lane) * f32   # kmask (double buffered)
    u += 2 * D * tile_v * bf16                 # wv tile (double buffered)
    u += 2 * 8 * tile_v * f32                  # bv tile (sublane padded, x2 buf)
    u += nbS * D * bf16                        # hid_acc scratch
    u += 3 * nbS * lane * f32                  # m/l/a scratches (lane padded)
    u += 2 * nbS * tile_v * f32                # live f32 logits + exp temporaries
    u += 2 * nbS * max(M, lane) * f32          # v==0 scores/softmax temporaries
    u += 2 * max(nb, 8) * lane * f32           # output block
    return u


def _pick_tile_v(V, nbS, D, M, budget, nb):
    """Largest vocab tile (multiple of 128 dividing V, <= 8192) fitting the budget."""
    cands = [c for c in range(128, min(V, 8192) + 1, 128) if V % c == 0]
    if not cands:
        return V
    for c in sorted(cands, reverse=True):
        if _vmem_usage_bytes(nbS, D, M, c, nb) <= budget:
            return c
    return cands[0]                            # smallest tile; shrink nb if this OOMs


# ---------------------------------------------------------------------------
# Kernel: knowledge attention + streamed MLM logits + online-logsumexp CE.
# grid = (N // nb, V // tile_v); axis 0 "parallel" (example blocks),
# axis 1 "arbitrary" (vocab tiles, reduction).
# ---------------------------------------------------------------------------
def _mlm_loss_kernel(h_ref, km_ref, valid_ref, wvans_ref, bans_ref,
                     k_ref, wv_ref, bv_ref, loss_ref,
                     hid_acc, m_acc, l_acc, a_acc):
    nbS, D = h_ref.shape          # flattened rows = nb * S
    nb, M = km_ref.shape          # examples per block, knowledge items
    S = nbS // nb                 # sequence length (multiple of 8)
    v = pl.program_id(1)

    # ------- v == 0: knowledge attention + accumulator init (once per block)
    @pl.when(v == 0)
    def _():
        h = h_ref[...]                               # (nbS, D) bf16
        K = k_ref[...]                               # (M, D)   bf16
        # attention scores, bf16 MXU with f32 accumulation
        scores = jax.lax.dot_general(
            h, K, (((1,), (1,)), ((), ())),
            preferred_element_type=jnp.float32)      # (nbS, M)
        # additive mask bias (1 - m) * -1e5, per-example -> per-row via a
        # reshape-based broadcast (no (nbS, nb) expander matmul).
        bias = (1.0 - km_ref[...]) * -100000.0       # (nb, M)
        scores3 = scores.reshape(nb, S, M) + bias[:, None, :]
        # softmax over knowledge items (EUP reciprocal instead of divide)
        mx = jnp.max(scores3, axis=-1, keepdims=True)
        p3 = jnp.exp(scores3 - mx)
        p3 = p3 * pl.reciprocal(jnp.sum(p3, axis=-1, keepdims=True), approx=True)
        p = p3.reshape(nbS, M)
        ctx = jnp.dot(p.astype(jnp.bfloat16), K,
                      preferred_element_type=jnp.float32)    # (nbS, D)
        hid = (h.astype(jnp.float32) + ctx).astype(jnp.bfloat16)
        hid_acc[...] = hid
        # answer logit via the pre-gathered wv column (hoisted out of the
        # per-vocab-tile loop, review item 5)
        a_acc[...] = (jnp.sum(hid.astype(jnp.float32)
                              * wvans_ref[...].astype(jnp.float32),
                              axis=-1, keepdims=True)
                      + bans_ref[...])
        # online-logsumexp state
        m_acc[...] = jnp.full_like(m_acc, -jnp.inf)
        l_acc[...] = jnp.zeros_like(l_acc)

    # ------- every v: one (nbS, tile_v) logits tile, bf16 MXU / f32 accumulate
    logits = jnp.dot(hid_acc[...], wv_ref[...],
                     preferred_element_type=jnp.float32) + bv_ref[...]

    # online logsumexp update (all f32)
    m_prev = m_acc[...]
    m_new = jnp.maximum(m_prev, jnp.max(logits, axis=-1, keepdims=True))
    l_acc[...] = (l_acc[...] * jnp.exp(m_prev - m_new)
                  + jnp.sum(jnp.exp(logits - m_new), axis=-1, keepdims=True))
    m_acc[...] = m_new

    # ------- v == last: finalize per-token CE, mean over S, per-example store
    @pl.when(v == pl.num_programs(1) - 1)
    def _():
        lse = m_acc[...] + jnp.log(l_acc[...])                      # (nbS, 1)
        # label == -100 (HF ignore_index) positions contribute 0, but S stays
        # the divisor: matches CrossEntropyLoss(reduction='none') followed by
        # torch.mean over the token dim in WinogradModel.mask().
        ce = (lse - a_acc[...]) * valid_ref[...]                    # (nbS, 1)
        per_ex = jnp.sum(ce.reshape(nb, S, 1), axis=1) * (1.0 / S)  # (nb, 1)
        loss_ref[0] = per_ex


def per_example_losses(hidden2, kmask, valid, wv_ans, b_ans, knowledge, wv, bv,
                       *, nb, tile_v, vmem_limit):
    NS, D = hidden2.shape
    N, M = kmask.shape
    S = NS // N
    V = wv.shape[1]
    assert N % nb == 0 and V % tile_v == 0
    assert nb == N or nb % 8 == 0            # kmask block sublane constraint
    assert S % 8 == 0                        # flattened (nb*S, D) block alignment
    n_blk = N // nb

    out = pl.pallas_call(
        _mlm_loss_kernel,
        out_shape=jax.ShapeDtypeStruct((n_blk, nb, 1), jnp.float32),
        grid_spec=pltpu.PrefetchScalarGridSpec(
            num_scalar_prefetch=0,
            grid=(n_blk, V // tile_v),
            in_specs=[
                pl.BlockSpec((nb * S, D), lambda i, v: (i, 0)),   # hidden (bf16)
                pl.BlockSpec((nb, M), lambda i, v: (i, 0)),       # knowledge_mask
                pl.BlockSpec((nb * S, 1), lambda i, v: (i, 0)),   # valid-token mask
                pl.BlockSpec((nb * S, D), lambda i, v: (i, 0)),   # wv[:, answers] (bf16)
                pl.BlockSpec((nb * S, 1), lambda i, v: (i, 0)),   # bv[answers]
                pl.BlockSpec((M, D), lambda i, v: (0, 0)),        # knowledge (bf16)
                pl.BlockSpec((D, tile_v), lambda i, v: (0, v)),   # wv tile (bf16)
                pl.BlockSpec((1, tile_v), lambda i, v: (0, v)),   # bv tile
            ],
            out_specs=pl.BlockSpec((1, nb, 1), lambda i, v: (i, 0, 0)),
            scratch_shapes=[
                pltpu.VMEM((nb * S, D), jnp.bfloat16),   # hidden + knowledge ctx
                pltpu.VMEM((nb * S, 1), jnp.float32),    # running max
                pltpu.VMEM((nb * S, 1), jnp.float32),    # running sum-exp
                pltpu.VMEM((nb * S, 1), jnp.float32),    # answer logit
            ],
        ),
        compiler_params=pltpu.CompilerParams(
            dimension_semantics=("parallel", "arbitrary"),
            vmem_limit_bytes=vmem_limit,
        ),
    )(hidden2, kmask, valid, wv_ans, b_ans, knowledge, wv, bv)
    return out.reshape(N)


# ---------------------------------------------------------------------------
# Full forward (mask branch, static knowledge).
# ---------------------------------------------------------------------------
def winograd_forward(params, data, *, nb=None, tile_v=None):
    emb, wv, bv = params
    tokens = data["input_ids"]                 # (N, S) int32
    answers = data["answers"]                  # (N, S) int32 (-100 = ignore)
    knowledge = data["knowledge"]              # (M, D)
    kmask = data["knowledge_mask"]             # (N, M) float 0/1 (raw)
    index = data["index"]                      # (N,) batch-item index
    slot = data["slot"]                        # (N,) candidate slot (j counter)
    labels = data["labels"].astype(jnp.int32)  # (B,)
    B = labels.shape[0]
    N, S = tokens.shape
    D = emb.shape[1]
    V = wv.shape[1]
    M = knowledge.shape[0]
    assert S % 8 == 0 and V % 128 == 0         # pad vocab to a lane multiple

    # nb heuristic: on 2-TC chips (v7x) split example blocks across cores if
    # the kmask block stays 8-aligned and nbS stays MXU-friendly (>=256 rows);
    # on 1-TC chips keep nb=N so wv is streamed exactly once.
    if nb is None:
        nb = N
        if _tensorcores_per_chip() >= 2:
            half = N // 2
            if N % 2 == 0 and half % 8 == 0 and half * S >= 256:
                nb = half
    assert N % nb == 0
    nbS = nb * S

    # VMEM budget and vocab tile sizing from an explicit formula (the f32
    # (nbS, tile_v) logits/exp temporaries dominate, not the wv tile).
    budget = _vmem_budget_bytes()
    if tile_v is None:
        tile_v = _pick_tile_v(V, nbS, D, M, budget, nb)

    # glue: embedding lookup stands in for the pretrained sent_model encoder;
    # stream activations / weights to the kernel in bf16 (f32 accumulation
    # inside), keep mask / bias / CE math in f32.
    hidden = jnp.take(emb, tokens, axis=0)                       # (N, S, D)
    hidden2 = hidden.reshape(N * S, D).astype(jnp.bfloat16)

    ans_flat = answers.reshape(N * S).astype(jnp.int32)
    valid = (ans_flat != IGNORE_INDEX).astype(jnp.float32).reshape(N * S, 1)
    ans_cl = jnp.maximum(ans_flat, 0)          # clamp ignore_index before gather
    wv_ans = jnp.take(wv.T, ans_cl, axis=0).astype(jnp.bfloat16)   # (N*S, D)
    b_ans = jnp.take(bv, ans_cl).reshape(N * S, 1).astype(jnp.float32)

    losses = per_example_losses(
        hidden2, kmask.astype(jnp.float32), valid, wv_ans, b_ans,
        knowledge.astype(jnp.bfloat16), wv.astype(jnp.bfloat16),
        bv.reshape(1, -1).astype(jnp.float32),
        nb=nb, tile_v=tile_v, vmem_limit=budget)

    # scatter per-candidate losses into temp[B, 5] exactly like the python loop
    temp = jnp.zeros((B, 5), jnp.float32).at[index, slot].set(losses)

    # margin loss + argmin prediction over (B, 5): trivial size -> plain JAX
    rows = jnp.arange(B)
    li = temp[rows, labels]                          # temp[i][label]
    oi = temp[rows, jnp.maximum(1 - labels, 0)]      # temp[i][relu(1-label)]
    per = li + ALPHA * jnp.maximum(li - oi + BETA, 0.0)
    loss = jnp.sum(per) / B
    prediction = jnp.argmin(
        jnp.where(temp == 0.0, jnp.float32(10000.0), temp), axis=1)

    return {"loss": loss, "prediction": prediction, "knowledge": None}


def init_params(key, vocab, D):
    k1, k2 = jax.random.split(key, 2)
    emb = (0.02 * jax.random.normal(k1, (vocab, D))).astype(jnp.float32)
    wv = (0.02 * jax.random.normal(k2, (D, vocab))).astype(jnp.float32)
    bv = jnp.zeros((vocab,), jnp.float32)
    return emb, wv, bv


if __name__ == "__main__":
    key = jax.random.PRNGKey(0)
    B, C = 2, 2          # batch items, candidates per item
    N = B * C            # total candidate sentences
    S, D, M, V = 8, 128, 128, 256   # lane/sublane-aligned toy sizes

    kp, kt, ka, kk, km = jax.random.split(key, 5)
    params = init_params(kp, V, D)

    answers = jax.random.randint(ka, (N, S), 0, V, dtype=jnp.int32)
    answers = answers.at[:, -1].set(IGNORE_INDEX)   # exercise the ignore path

    data = {
        "input_ids": jax.random.randint(kt, (N, S), 0, V, dtype=jnp.int32),
        "answers": answers,
        "knowledge": (0.1 * jax.random.normal(kk, (M, D))).astype(jnp.float32),
        "knowledge_mask": jax.random.bernoulli(km, 0.8, (N, M)).astype(jnp.float32),
        "index": jnp.array([0, 0, 1, 1], dtype=jnp.int32),
        "slot": jnp.array([0, 1, 0, 1], dtype=jnp.int32),
        "labels": jnp.array([0, 1], dtype=jnp.int32),
    }

    out = winograd_forward(params, data)
    jax.block_until_ready(out)
    assert out["loss"].shape == ()
    assert out["prediction"].shape == (B,)
    assert bool(jnp.isfinite(out["loss"]))
    print("KERNEL_OK")
</pallas_src>

<mosaic_0001>
module attributes {stable_mosaic.version = 11 : i64} {
  func.func @_mlm_loss_kernel(%arg0: i32, %arg1: i32, %arg2: memref<32x128xbf16, #tpu.memory_space<vmem>>, %arg3: memref<4x128xf32, #tpu.memory_space<vmem>>, %arg4: memref<32x1xf32, #tpu.memory_space<vmem>>, %arg5: memref<32x128xbf16, #tpu.memory_space<vmem>>, %arg6: memref<32x1xf32, #tpu.memory_space<vmem>>, %arg7: memref<128x128xbf16, #tpu.memory_space<vmem>>, %arg8: memref<128x256xbf16, #tpu.memory_space<vmem>>, %arg9: memref<1x256xf32, #tpu.memory_space<vmem>>, %arg10: memref<1x4x1xf32, #tpu.memory_space<vmem>>, %arg11: memref<32x128xbf16, #tpu.memory_space<vmem>>, %arg12: memref<32x1xf32, #tpu.memory_space<vmem>>, %arg13: memref<32x1xf32, #tpu.memory_space<vmem>>, %arg14: memref<32x1xf32, #tpu.memory_space<vmem>>) attributes {dimension_semantics = [#tpu.dimension_semantics<parallel>, #tpu.dimension_semantics<arbitrary>], iteration_bounds = array<i64: 1, 1>, scalar_prefetch = 0 : i64, scratch_operands = 4 : i64, tpu.core_type = #tpu.core_type<tc>, window_params = [{transform_indices = @transform_0, window_bounds = array<i64: 32, 128>}, {transform_indices = @transform_1, window_bounds = array<i64: 4, 128>}, {transform_indices = @transform_2, window_bounds = array<i64: 32, 1>}, {transform_indices = @transform_3, window_bounds = array<i64: 32, 128>}, {transform_indices = @transform_4, window_bounds = array<i64: 32, 1>}, {pipeline_mode = #tpu.pipeline_mode<synchronous>, transform_indices = @transform_5, window_bounds = array<i64: 128, 128>}, {transform_indices = @transform_6, window_bounds = array<i64: 128, 256>}, {transform_indices = @transform_7, window_bounds = array<i64: 1, 256>}, {transform_indices = @transform_8, window_bounds = array<i64: 1, 4, 1>}]} {
    %c0_i32 = arith.constant 0 : i32
    %0 = arith.cmpi eq, %arg1, %c0_i32 : i32
    %1 = arith.extui %0 : i1 to i32
    %c0_i32_0 = arith.constant 0 : i32
    %2 = arith.cmpi ne, %1, %c0_i32_0 : i32
    scf.if %2 {
      %c0_18 = arith.constant 0 : index
      %c0_19 = arith.constant 0 : index
      %28 = vector.load %arg2[%c0_18, %c0_19] : memref<32x128xbf16, #tpu.memory_space<vmem>>, vector<32x128xbf16>
      %c0_20 = arith.constant 0 : index
      %c0_21 = arith.constant 0 : index
      %29 = vector.load %arg7[%c0_20, %c0_21] : memref<128x128xbf16, #tpu.memory_space<vmem>>, vector<128x128xbf16>
      %cst_22 = arith.constant dense<0.000000e+00> : vector<32x128xf32>
      %30 = tpu.matmul %28, %29, %cst_22 {dimension_numbers = #tpu.dot_dimension_numbers<[1], [1], [0], [0], [0, 0, 1, 0], [], []>} : vector<32x128xbf16>, vector<128x128xbf16>, vector<32x128xf32> -> vector<32x128xf32>
      %c0_23 = arith.constant 0 : index
      %c0_24 = arith.constant 0 : index
      %31 = vector.load %arg3[%c0_23, %c0_24] : memref<4x128xf32, #tpu.memory_space<vmem>>, vector<4x128xf32>
      %cst_25 = arith.constant 1.000000e+00 : f32
      %32 = vector.broadcast %cst_25 : f32 to vector<4x128xf32>
      %33 = arith.subf %32, %31 : vector<4x128xf32>
      %cst_26 = arith.constant -1.000000e+05 : f32
      %34 = vector.broadcast %cst_26 : f32 to vector<4x128xf32>
      %35 = arith.mulf %33, %34 : vector<4x128xf32>
      %36 = vector.shape_cast %30 : vector<32x128xf32> to vector<4x8x128xf32>
      %37 = vector.shape_cast %35 : vector<4x128xf32> to vector<4x1x128xf32>
      %38 = vector.broadcast %37 : vector<4x1x128xf32> to vector<4x8x128xf32>
      %39 = arith.addf %36, %38 : vector<4x8x128xf32>
      %cst_27 = arith.constant dense<0xFF800000> : vector<4x8xf32>
      %40 = vector.multi_reduction <maximumf>, %39, %cst_27 [2] : vector<4x8x128xf32> to vector<4x8xf32>
      %41 = vector.shape_cast %40 : vector<4x8xf32> to vector<4x8x1xf32>
      %42 = vector.broadcast %41 : vector<4x8x1xf32> to vector<4x8x128xf32>
      %43 = arith.subf %39, %42 : vector<4x8x128xf32>
      %44 = math.exp %43 : vector<4x8x128xf32>
      %cst_28 = arith.constant dense<0.000000e+00> : vector<4x8xf32>
      %45 = vector.multi_reduction <add>, %44, %cst_28 [2] : vector<4x8x128xf32> to vector<4x8xf32>
      %46 = vector.shape_cast %45 : vector<4x8xf32> to vector<4x8x1xf32>
      %47 = tpu.reciprocal %46 {approx = true} : vector<4x8x1xf32> -> vector<4x8x1xf32>
      %48 = vector.broadcast %47 : vector<4x8x1xf32> to vector<4x8x128xf32>
      %49 = arith.mulf %44, %48 : vector<4x8x128xf32>
      %50 = vector.shape_cast %49 : vector<4x8x128xf32> to vector<32x128xf32>
      %51 = arith.truncf %50 : vector<32x128xf32> to vector<32x128xbf16>
      %cst_29 = arith.constant dense<0.000000e+00> : vector<32x128xf32>
      %52 = tpu.matmul %51, %29, %cst_29 {dimension_numbers = #tpu.dot_dimension_numbers<[1], [0], [0], [1], [0, 0, 1, 1], [], []>} : vector<32x128xbf16>, vector<128x128xbf16>, vector<32x128xf32> -> vector<32x128xf32>
      %53 = arith.extf %28 : vector<32x128xbf16> to vector<32x128xf32>
      %54 = arith.addf %53, %52 : vector<32x128xf32>
      %55 = arith.truncf %54 : vector<32x128xf32> to vector<32x128xbf16>
      %c0_30 = arith.constant 0 : index
      %c0_31 = arith.constant 0 : index
      %56 = vector.load %arg11[%c0_30, %c0_31] : memref<32x128xbf16, #tpu.memory_space<vmem>>, vector<32x128xbf16>
      tpu.vector_store %arg11[%c0_30, %c0_31], %55 {strides = array<i32>} : memref<32x128xbf16, #tpu.memory_space<vmem>>, vector<32x128xbf16>,
      %57 = arith.extf %55 : vector<32x128xbf16> to vector<32x128xf32>
      %c0_32 = arith.constant 0 : index
      %c0_33 = arith.constant 0 : index
      %58 = vector.load %arg5[%c0_32, %c0_33] : memref<32x128xbf16, #tpu.memory_space<vmem>>, vector<32x128xbf16>
      %59 = arith.extf %58 : vector<32x128xbf16> to vector<32x128xf32>
      %60 = arith.mulf %57, %59 : vector<32x128xf32>
      %cst_34 = arith.constant dense<0.000000e+00> : vector<32xf32>
      %61 = vector.multi_reduction <add>, %60, %cst_34 [1] : vector<32x128xf32> to vector<32xf32>
      %62 = vector.shape_cast %61 : vector<32xf32> to vector<32x1xf32>
      %c0_35 = arith.constant 0 : index
      %c0_36 = arith.constant 0 : index
      %63 = vector.load %arg6[%c0_35, %c0_36] : memref<32x1xf32, #tpu.memory_space<vmem>>, vector<32x1xf32>
      %64 = arith.addf %62, %63 : vector<32x1xf32>
      %c0_37 = arith.constant 0 : index
      %c0_38 = arith.constant 0 : index
      %65 = vector.load %arg14[%c0_37, %c0_38] : memref<32x1xf32, #tpu.memory_space<vmem>>, vector<32x1xf32>
      tpu.vector_store %arg14[%c0_37, %c0_38], %64 {strides = array<i32>} : memref<32x1xf32, #tpu.memory_space<vmem>>, vector<32x1xf32>,
      %cst_39 = arith.constant 0xFF800000 : f32
      %66 = vector.broadcast %cst_39 : f32 to vector<32x1xf32>
      %c0_40 = arith.constant 0 : index
      %c0_41 = arith.constant 0 : index
      %67 = vector.load %arg12[%c0_40, %c0_41] : memref<32x1xf32, #tpu.memory_space<vmem>>, vector<32x1xf32>
      tpu.vector_store %arg12[%c0_40, %c0_41], %66 {strides = array<i32>} : memref<32x1xf32, #tpu.memory_space<vmem>>, vector<32x1xf32>,
      %cst_42 = arith.constant 0.000000e+00 : f32
      %68 = vector.broadcast %cst_42 : f32 to vector<32x1xf32>
      %c0_43 = arith.constant 0 : index
      %c0_44 = arith.constant 0 : index
      %69 = vector.load %arg13[%c0_43, %c0_44] : memref<32x1xf32, #tpu.memory_space<vmem>>, vector<32x1xf32>
      tpu.vector_store %arg13[%c0_43, %c0_44], %68 {strides = array<i32>} : memref<32x1xf32, #tpu.memory_space<vmem>>, vector<32x1xf32>,
    } else {
    }
    %c0 = arith.constant 0 : index
    %c0_1 = arith.constant 0 : index
    %3 = vector.load %arg11[%c0, %c0_1] : memref<32x128xbf16, #tpu.memory_space<vmem>>, vector<32x128xbf16>
    %c0_2 = arith.constant 0 : index
    %c0_3 = arith.constant 0 : index
    %4 = vector.load %arg8[%c0_2, %c0_3] : memref<128x256xbf16, #tpu.memory_space<vmem>>, vector<128x256xbf16>
    %cst = arith.constant dense<0.000000e+00> : vector<32x256xf32>
    %5 = tpu.matmul %3, %4, %cst {dimension_numbers = #tpu.dot_dimension_numbers<[1], [0], [0], [1], [0, 0, 1, 1], [], []>} : vector<32x128xbf16>, vector<128x256xbf16>, vector<32x256xf32> -> vector<32x256xf32>
    %c0_4 = arith.constant 0 : index
    %c0_5 = arith.constant 0 : index
    %6 = vector.load %arg9[%c0_4, %c0_5] : memref<1x256xf32, #tpu.memory_space<vmem>>, vector<1x256xf32>
    %7 = vector.broadcast %6 : vector<1x256xf32> to vector<32x256xf32>
    %8 = arith.addf %5, %7 : vector<32x256xf32>
    %c0_6 = arith.constant 0 : index
    %c0_7 = arith.constant 0 : index
    %9 = vector.load %arg12[%c0_6, %c0_7] : memref<32x1xf32, #tpu.memory_space<vmem>>, vector<32x1xf32>
    %cst_8 = arith.constant dense<0xFF800000> : vector<32xf32>
    %10 = vector.multi_reduction <maximumf>, %8, %cst_8 [1] : vector<32x256xf32> to vector<32xf32>
    %11 = vector.shape_cast %10 : vector<32xf32> to vector<32x1xf32>
    %12 = arith.maximumf %9, %11 : vector<32x1xf32>
    %c0_9 = arith.constant 0 : index
    %c0_10 = arith.constant 0 : index
    %13 = vector.load %arg13[%c0_9, %c0_10] : memref<32x1xf32, #tpu.memory_space<vmem>>, vector<32x1xf32>
    %14 = arith.subf %9, %12 : vector<32x1xf32>
    %15 = math.exp %14 : vector<32x1xf32>
    %16 = arith.mulf %13, %15 : vector<32x1xf32>
    %17 = vector.broadcast %12 : vector<32x1xf32> to vector<32x256xf32>
    %18 = arith.subf %8, %17 : vector<32x256xf32>
    %19 = math.exp %18 : vector<32x256xf32>
    %cst_11 = arith.constant dense<0.000000e+00> : vector<32xf32>
    %20 = vector.multi_reduction <add>, %19, %cst_11 [1] : vector<32x256xf32> to vector<32xf32>
    %21 = vector.shape_cast %20 : vector<32xf32> to vector<32x1xf32>
    %22 = arith.addf %16, %21 : vector<32x1xf32>
    %c0_12 = arith.constant 0 : index
    %c0_13 = arith.constant 0 : index
    %23 = vector.load %arg13[%c0_12, %c0_13] : memref<32x1xf32, #tpu.memory_space<vmem>>, vector<32x1xf32>
    tpu.vector_store %arg13[%c0_12, %c0_13], %22 {strides = array<i32>} : memref<32x1xf32, #tpu.memory_space<vmem>>, vector<32x1xf32>,
    %c0_14 = arith.constant 0 : index
    %c0_15 = arith.constant 0 : index
    %24 = vector.load %arg12[%c0_14, %c0_15] : memref<32x1xf32, #tpu.memory_space<vmem>>, vector<32x1xf32>
    tpu.vector_store %arg12[%c0_14, %c0_15], %12 {strides = array<i32>} : memref<32x1xf32, #tpu.memory_space<vmem>>, vector<32x1xf32>,
    %c0_i32_16 = arith.constant 0 : i32
    %25 = arith.cmpi eq, %arg1, %c0_i32_16 : i32
    %26 = arith.extui %25 : i1 to i32
    %c0_i32_17 = arith.constant 0 : i32
    %27 = arith.cmpi ne, %26, %c0_i32_17 : i32
    scf.if %27 {
      %c0_18 = arith.constant 0 : index
      %c0_19 = arith.constant 0 : index
      %28 = vector.load %arg12[%c0_18, %c0_19] : memref<32x1xf32, #tpu.memory_space<vmem>>, vector<32x1xf32>
      %c0_20 = arith.constant 0 : index
      %c0_21 = arith.constant 0 : index
      %29 = vector.load %arg13[%c0_20, %c0_21] : memref<32x1xf32, #tpu.memory_space<vmem>>, vector<32x1xf32>
      %30 = math.log %29 : vector<32x1xf32>
      %31 = arith.addf %28, %30 : vector<32x1xf32>
      %c0_22 = arith.constant 0 : index
      %c0_23 = arith.constant 0 : index
      %32 = vector.load %arg14[%c0_22, %c0_23] : memref<32x1xf32, #tpu.memory_space<vmem>>, vector<32x1xf32>
      %33 = arith.subf %31, %32 : vector<32x1xf32>
      %c0_24 = arith.constant 0 : index
      %c0_25 = arith.constant 0 : index
      %34 = vector.load %arg4[%c0_24, %c0_25] : memref<32x1xf32, #tpu.memory_space<vmem>>, vector<32x1xf32>
      %35 = arith.mulf %33, %34 : vector<32x1xf32>
      %36 = vector.shape_cast %35 : vector<32x1xf32> to vector<4x8x1xf32>
      %cst_26 = arith.constant dense<0.000000e+00> : vector<4x1xf32>
      %37 = vector.multi_reduction <add>, %36, %cst_26 [1] : vector<4x8x1xf32> to vector<4x1xf32>
      %cst_27 = arith.constant 1.250000e-01 : f32
      %38 = vector.broadcast %cst_27 : f32 to vector<4x1xf32>
      %39 = arith.mulf %37, %38 : vector<4x1xf32>
      %c0_28 = arith.constant 0 : index
      %c0_29 = arith.constant 0 : index
      %c0_30 = arith.constant 0 : index
      %40 = vector.load %arg10[%c0_28, %c0_29, %c0_30] : memref<1x4x1xf32, #tpu.memory_space<vmem>>, vector<1x4x1xf32>
      %41 = vector.shape_cast %40 : vector<1x4x1xf32> to vector<4x1xf32>
      %42 = vector.shape_cast %39 : vector<4x1xf32> to vector<1x4x1xf32>
      tpu.vector_store %arg10[%c0_28, %c0_29, %c0_30], %42 {strides = array<i32>} : memref<1x4x1xf32, #tpu.memory_space<vmem>>, vector<1x4x1xf32>,
    } else {
    }
    return
  }
  func.func @transform_0(%arg0: i32, %arg1: i32) -> (i32, i32) {
    %c0_i32 = arith.constant 0 : i32
    %c0_i32_0 = arith.constant 0 : i32
    return %arg0, %c0_i32 : i32, i32
  }
  func.func @transform_1(%arg0: i32, %arg1: i32) -> (i32, i32) {
    %c0_i32 = arith.constant 0 : i32
    %c0_i32_0 = arith.constant 0 : i32
    return %arg0, %c0_i32 : i32, i32
  }
  func.func @transform_2(%arg0: i32, %arg1: i32) -> (i32, i32) {
    %c0_i32 = arith.constant 0 : i32
    %c0_i32_0 = arith.constant 0 : i32
    return %arg0, %c0_i32 : i32, i32
  }
  func.func @transform_3(%arg0: i32, %arg1: i32) -> (i32, i32) {
    %c0_i32 = arith.constant 0 : i32
    %c0_i32_0 = arith.constant 0 : i32
    return %arg0, %c0_i32 : i32, i32
  }
  func.func @transform_4(%arg0: i32, %arg1: i32) -> (i32, i32) {
    %c0_i32 = arith.constant 0 : i32
    %c0_i32_0 = arith.constant 0 : i32
    return %arg0, %c0_i32 : i32, i32
  }
  func.func @transform_5(%arg0: i32, %arg1: i32) -> (i32, i32) {
    %c0_i32 = arith.constant 0 : i32
    %c0_i32_0 = arith.constant 0 : i32
    %c0_i32_1 = arith.constant 0 : i32
    return %c0_i32, %c0_i32_0 : i32, i32
  }
  func.func @transform_6(%arg0: i32, %arg1: i32) -> (i32, i32) {
    %c0_i32 = arith.constant 0 : i32
    %c0_i32_0 = arith.constant 0 : i32
    return %c0_i32, %arg1 : i32, i32
  }
  func.func @transform_7(%arg0: i32, %arg1: i32) -> (i32, i32) {
    %c0_i32 = arith.constant 0 : i32
    %c0_i32_0 = arith.constant 0 : i32
    return %c0_i32, %arg1 : i32, i32
  }
  func.func @transform_8(%arg0: i32, %arg1: i32) -> (i32, i32, i32) {
    %c0_i32 = arith.constant 0 : i32
    %c0_i32_0 = arith.constant 0 : i32
    %c0_i32_1 = arith.constant 0 : i32
    return %arg0, %c0_i32, %c0_i32_0 : i32, i32, i32
  }
}

</mosaic_0001>

<llo_original>
// kernel: tpu_custom_call.1
$region0: #{tpu_custom_call.1}
  #allocation0 [shape = 'u32[]', space=smem, size = 0x4, offset = 0x4, fixed_abs, tag = 'smem constant byte address 0x4 - core index']
  #allocation1 [shape = 'u32[72,128]{1,0:T(1,128)}', space=vmem, size = 0x9000, scoped, tag = 'internal scratch']
  #allocation2 [shape = 'bf16[32,128]{1,0:T(8,128)(2,1)}', space=vmem, size = 0x2000, scoped, tag = 'scratch operand']
  #allocation3 [shape = 'f32[32,1]{1,0:T(8,128)}', space=vmem, size = 0x4000, scoped, tag = 'scratch operand']
  #allocation4 [shape = 'f32[32,1]{1,0:T(8,128)}', space=vmem, size = 0x4000, scoped, tag = 'scratch operand']
  #allocation5 [shape = 'f32[32,1]{1,0:T(8,128)}', space=vmem, size = 0x4000, scoped, tag = 'scratch operand']
  %s0 = inlined_call_operand.hbm [shape: bf16[32,128], index: 0, kind: input, shape index: {}]
  %s1 = inlined_call_operand.hbm [shape: f32[4,128], index: 1, kind: input, shape index: {}]
  %s2 = inlined_call_operand.vmem [shape: f32[32,1], index: 2, kind: input, shape index: {}]
  %s3 = inlined_call_operand.hbm [shape: bf16[32,128], index: 3, kind: input, shape index: {}]
  %s4 = inlined_call_operand.vmem [shape: f32[32,1], index: 4, kind: input, shape index: {}]
  %s5 = inlined_call_operand.vmem [shape: bf16[128,128], index: 5, kind: input, shape index: {}]
  %s6 = inlined_call_operand.hbm [shape: bf16[128,256], index: 6, kind: input, shape index: {}]
  %s7 = inlined_call_operand.vmem [shape: f32[1,256], index: 7, kind: input, shape index: {}]
  %s8 = inlined_call_operand.vmem [shape: f32[1,4,1], index: 8, kind: output, shape index: {}]
  %s9 = sld [smem:[#allocation0]]
  $region66: #{tpu_custom_call.1} parent=0
    _
  %s11 = ssub.s32 1, %s9
  %s12 = scalar_select 0, %s11, %s9
  $region1: #{tpu_custom_call.1} parent=0
    #allocation6 [shape = 'u8[8192]{0}', space=vmem, size = 0x2000, scoped, tag = 'input window, operand 0, single buffered']
    #allocation7 [shape = 's32[1]{0}', space=sflag, size = 0x4, scoped, tag = 'scoped memory for tpu_custom_call.1']
    #allocation8 [shape = 'u8[2048]{0}', space=vmem, size = 0x800, scoped, tag = 'input window, operand 1, single buffered']
    #allocation9 [shape = 's32[1]{0}', space=sflag, size = 0x4, scoped, tag = 'scoped memory for tpu_custom_call.1']
    #allocation10 [shape = 'u8[8192]{0}', space=vmem, size = 0x2000, scoped, tag = 'input window, operand 3, single buffered']
    #allocation11 [shape = 'u8[65536]{0}', space=vmem, size = 0x10000, scoped, tag = 'input window, operand 6, single buffered']
    #allocation12 [shape = 's32[1]{0}', space=sflag, size = 0x4, scoped, tag = 'scoped memory for tpu_custom_call.1']
    %13 = vsyncpa [#allocation7], 0
    %14 = vsyncpa [#allocation9], 0
    %15 = vsyncpa [#allocation12], 0
    // Predicated region
    $region2: #{tpu_custom_call.1} parent=1 // pred_check
      _
    $region3: #{tpu_custom_call.1} parent=1 // pred_check_branch
      %17 = sbr.rel (0) target = $region5
    $region4: #{tpu_custom_call.1} parent=1 // pred_region
      %19 = vsyncadd [#allocation7], 0
      %s20 = sshll.u32 %s0, 4
      %s21 = int_to_ptr.hbm [resolvable:$true] %s20
      %s22 = sshll.u32 [#allocation6], 4
      %s23 = int_to_ptr.vmem [resolvable:$true] %s22
      %28 = dma.hbm_to_vmem [thread:$0]  %s21, 256, %s23, [#allocation7], 64, 64, 4
    $region5: #{tpu_custom_call.1} parent=1 // pred_fallthru
      _
    // Predicated region
    $region6: #{tpu_custom_call.1} parent=1 // pred_check
      _
    $region7: #{tpu_custom_call.1} parent=1 // pred_check_branch
      %30 = sbr.rel (0) target = $region9
    $region8: #{tpu_custom_call.1} parent=1 // pred_region
      %32 = vsyncadd [#allocation9], 0
      %s34 = sshll.u32 %s1, 4
      %s35 = int_to_ptr.hbm [resolvable:$true] %s34
      %s36 = sshll.u32 [#allocation8], 4
      %s37 = int_to_ptr.vmem [resolvable:$true] %s36
      %39 = dma.hbm_to_vmem [thread:$0]  %s35, 64, %s37, [#allocation9]
    $region9: #{tpu_custom_call.1} parent=1 // pred_fallthru
      _
    // Predicated region
    $region10: #{tpu_custom_call.1} parent=1 // pred_check
      _
    $region11: #{tpu_custom_call.1} parent=1 // pred_check_branch
      %41 = sbr.rel (0) target = $region13
    $region12: #{tpu_custom_call.1} parent=1 // pred_region
      _
    $region13: #{tpu_custom_call.1} parent=1 // pred_fallthru
      _
    // Predicated region
    $region14: #{tpu_custom_call.1} parent=1 // pred_check
      _
    $region15: #{tpu_custom_call.1} parent=1 // pred_check_branch
      %43 = sbr.rel (0) target = $region17
    $region16: #{tpu_custom_call.1} parent=1 // pred_region
      %45 = vsyncadd [#allocation9], 0
      %s46 = sshll.u32 %s3, 4
      %s47 = int_to_ptr.hbm [resolvable:$true] %s46
      %s48 = sshll.u32 [#allocation10], 4
      %s49 = int_to_ptr.vmem [resolvable:$true] %s48
      %54 = dma.hbm_to_vmem [thread:$0]  %s47, 256, %s49, [#allocation9], 64, 64, 4
    $region17: #{tpu_custom_call.1} parent=1 // pred_fallthru
      _
    // Predicated region
    $region18: #{tpu_custom_call.1} parent=1 // pred_check
      _
    $region19: #{tpu_custom_call.1} parent=1 // pred_check_branch
      %56 = sbr.rel (0) target = $region21
    $region20: #{tpu_custom_call.1} parent=1 // pred_region
      _
    $region21: #{tpu_custom_call.1} parent=1 // pred_fallthru
      _
    // Predicated region
    $region22: #{tpu_custom_call.1} parent=1 // pred_check
      _
    $region23: #{tpu_custom_call.1} parent=1 // pred_check_branch
      %58 = sbr.rel (0) target = $region25
    $region24: #{tpu_custom_call.1} parent=1 // pred_region
      _
    $region25: #{tpu_custom_call.1} parent=1 // pred_fallthru
      _
    // Predicated region
    $region26: #{tpu_custom_call.1} parent=1 // pred_check
      _
    $region27: #{tpu_custom_call.1} parent=1 // pred_check_branch
      %60 = sbr.rel (0) target = $region29
    $region28: #{tpu_custom_call.1} parent=1 // pred_region
      %62 = vsyncadd [#allocation12], 0
      %s63 = sshll.u32 %s6, 4
      %s64 = int_to_ptr.hbm [resolvable:$true] %s63
      %s65 = sshll.u32 [#allocation11], 4
      %s66 = int_to_ptr.vmem [resolvable:$true] %s65
      %71 = dma.hbm_to_vmem [thread:$0]  %s64, 2048, %s66, [#allocation12], 128, 128, 8
    $region29: #{tpu_custom_call.1} parent=1 // pred_fallthru
      _
    // Predicated region
    $region30: #{tpu_custom_call.1} parent=1 // pred_check
      _
    $region31: #{tpu_custom_call.1} parent=1 // pred_check_branch
      %73 = sbr.rel (0) target = $region33
    $region32: #{tpu_custom_call.1} parent=1 // pred_region
      _
    $region33: #{tpu_custom_call.1} parent=1 // pred_fallthru
      _
    // Predicated region
    $region34: #{tpu_custom_call.1} parent=1 // pred_check
      _
    $region35: #{tpu_custom_call.1} parent=1 // pred_check_branch
      %75 = sbr.rel (0) target = $region37
    $region36: #{tpu_custom_call.1} parent=1 // pred_region
      %77 = dma.done [#allocation7], 256
    $region37: #{tpu_custom_call.1} parent=1 // pred_fallthru
      _
    // Predicated region
    $region38: #{tpu_custom_call.1} parent=1 // pred_check
      _
    $region39: #{tpu_custom_call.1} parent=1 // pred_check_branch
      %79 = sbr.rel (0) target = $region41
    $region40: #{tpu_custom_call.1} parent=1 // pred_region
      %81 = dma.done [#allocation9], 64
    $region41: #{tpu_custom_call.1} parent=1 // pred_fallthru
      _
    // Predicated region
    $region42: #{tpu_custom_call.1} parent=1 // pred_check
      _
    $region43: #{tpu_custom_call.1} parent=1 // pred_check_branch
      %83 = sbr.rel (0) target = $region45
    $region44: #{tpu_custom_call.1} parent=1 // pred_region
      %85 = dma.done [#allocation9], 256
    $region45: #{tpu_custom_call.1} parent=1 // pred_fallthru
      _
    // Predicated region
    $region46: #{tpu_custom_call.1} parent=1 // pred_check
      _
    $region47: #{tpu_custom_call.1} parent=1 // pred_check_branch
      %87 = sbr.rel (0) target = $region49
    $region48: #{tpu_custom_call.1} parent=1 // pred_region
      %89 = dma.done [#allocation12], 2048
    $region49: #{tpu_custom_call.1} parent=1 // pred_fallthru
      _
    %p90 = scmp.eq.s32.totalorder 0, 0
    // Predicated region
    $region50: #{tpu_custom_call.1} parent=1 // pred_check
      %p91 = pneg %p90
    $region51: #{tpu_custom_call.1} parent=1 // pred_check_branch
      %93 = sbr.rel (%p91) target = $region53
    $region52: #{tpu_custom_call.1} parent=1 // pred_region
      %v94 = vld [vmem:[#allocation6] sm:$0xf]
      %v95 = vld [vmem:[#allocation6 + $0x4] sm:$0xf]
      %v96 = vld [vmem:[#allocation6 + $0x8] sm:$0xf]
      %v97 = vld [vmem:[#allocation6 + $0xc] sm:$0xf]
      %v98 = vld [vmem:[%s5] sm:$0xf]
      %v99 = vld [vmem:[%s5 + $0x4] sm:$0xf]
      %v100 = vld [vmem:[%s5 + $0x8] sm:$0xf]
      %v101 = vld [vmem:[%s5 + $0xc] sm:$0xf]
      %v102 = vld [vmem:[%s5 + $0x10] sm:$0xf]
      %v103 = vld [vmem:[%s5 + $0x14] sm:$0xf]
      %v104 = vld [vmem:[%s5 + $0x18] sm:$0xf]
      %v105 = vld [vmem:[%s5 + $0x1c] sm:$0xf]
      %v106 = vld [vmem:[%s5 + $0x20] sm:$0xf]
      %v107 = vld [vmem:[%s5 + $0x24] sm:$0xf]
      %v108 = vld [vmem:[%s5 + $0x28] sm:$0xf]
      %v109 = vld [vmem:[%s5 + $0x2c] sm:$0xf]
      %v110 = vld [vmem:[%s5 + $0x30] sm:$0xf]
      %v111 = vld [vmem:[%s5 + $0x34] sm:$0xf]
      %v112 = vld [vmem:[%s5 + $0x38] sm:$0xf]
      %v113 = vld [vmem:[%s5 + $0x3c] sm:$0xf]
      %v118 = vunpack.c.l.b16 %v94
      %v119 = vunpack.c.l.b16 %v95
      %v120 = vunpack.c.l.b16 %v96
      %v121 = vunpack.c.l.b16 %v97
      %v122 = vpack.c.b16 %v119, %v118
      %v123 = vpack.c.b16 %v121, %v120
      %v142 = vunpack.c.l.b16 %v98
      %v143 = vunpack.c.l.b16 %v99
      %v144 = vunpack.c.l.b16 %v100
      %v145 = vunpack.c.l.b16 %v101
      %v146 = vunpack.c.l.b16 %v102
      %v147 = vunpack.c.l.b16 %v103
      %v148 = vunpack.c.l.b16 %v104
      %v149 = vunpack.c.l.b16 %v105
      %v150 = vunpack.c.l.b16 %v106
      %v151 = vunpack.c.l.b16 %v107
      %v152 = vunpack.c.l.b16 %v108
      %v153 = vunpack.c.l.b16 %v109
      %v154 = vunpack.c.l.b16 %v110
      %v155 = vunpack.c.l.b16 %v111
      %v156 = vunpack.c.l.b16 %v112
      %v157 = vunpack.c.l.b16 %v113
      %v158 = vpack.c.b16 %v143, %v142
      %v159 = vpack.c.b16 %v145, %v144
      %v160 = vpack.c.b16 %v147, %v146
      %v161 = vpack.c.b16 %v149, %v148
      %v162 = vpack.c.b16 %v151, %v150
      %v163 = vpack.c.b16 %v153, %v152
      %v164 = vpack.c.b16 %v155, %v154
      %v165 = vpack.c.b16 %v157, %v156
      %174 = vmatpush.bf16.xpose.msra.mxu0 %v165
      %175 = vmatpush.bf16.xpose.msra.mxu0 %v164
      %176 = vmatpush.bf16.xpose.msra.mxu0 %v163
      %177 = vmatpush.bf16.xpose.msra.mxu0 %v162
      %178 = vmatpush.bf16.xpose.msra.mxu0 %v161
      %179 = vmatpush.bf16.xpose.msra.mxu0 %v160
      %180 = vmatpush.bf16.xpose.msra.mxu0 %v159
      %181 = vmatpush.bf16.xpose.msra.mxu0 %v158
      %182 = vmatmul.bf16.gmra.mxu0 %v122
      %v183 = vpop.f32.mrf.mxu0
      %v184 = vadd.f32 0.0, %v183
      %v185 = vpop.f32.mrf.mxu0
      %v186 = vadd.f32 0.0, %v185
      %187 = vmatmul.bf16.gmra.mxu0 %v123
      %v188 = vpop.f32.mrf.mxu0
      %v189 = vadd.f32 0.0, %v188
      %v190 = vpop.f32.mrf.mxu0
      %v191 = vadd.f32 0.0, %v190
      %192 = vdwg.mxu0
      %v193 = vld [vmem:[#allocation8] sm:$0xf]
      %v194 = vsub.f32 1.0, %v193
      %v195 = vmul.f32 %v194, -100000.0
      %v197 = vrot.slane %v195, 1
      %v198 = vrot.slane %v195, 2
      %v199 = vrot.slane %v195, 3
      %v200 = vperm.slane %v195, 0
      %v201 = vperm.slane %v197, 0
      %v202 = vperm.slane %v198, 0
      %v203 = vperm.slane %v199, 0
      %v208 = vadd.f32 %v184, %v200
      %v209 = vadd.f32 %v186, %v201
      %v210 = vadd.f32 %v189, %v202
      %v211 = vadd.f32 %v191, %v203
      %212 = vmax.xlane.f32.xlu0 %v208
      %v213 = vpop.xlane.xlu0 %212
      %214 = vmax.xlane.f32.xlu0 %v209
      %v215 = vpop.xlane.xlu0 %214
      %216 = vmax.xlane.f32.xlu0 %v210
      %v217 = vpop.xlane.xlu0 %216
      %218 = vmax.xlane.f32.xlu0 %v211
      %v219 = vpop.xlane.xlu0 %218
      %v220 = vsub.f32 %v208, %v213
      %v221 = vsub.f32 %v209, %v215
      %v222 = vsub.f32 %v210, %v217
      %v223 = vsub.f32 %v211, %v219
      %v224 = vmul.f32 %v220, 1.442695
      %v225 = vpow.pop %v224
      %v226 = vmul.f32 %v221, 1.442695
      %v227 = vpow.pop %v226
      %v228 = vmul.f32 %v222, 1.442695
      %v229 = vpow.pop %v228
      %v230 = vmul.f32 %v223, 1.442695
      %v231 = vpow.pop %v230
      %232 = vadd.xlane.f32.xlu0 %v225
      %v233 = vpop.xlane.xlu0 %232
      %234 = vadd.xlane.f32.xlu0 %v227
      %v235 = vpop.xlane.xlu0 %234
      %236 = vadd.xlane.f32.xlu0 %v229
      %v237 = vpop.xlane.xlu0 %236
      %238 = vadd.xlane.f32.xlu0 %v231
      %v239 = vpop.xlane.xlu0 %238
      %v240 = vrcp.pop %v233
      %v241 = vrcp.pop %v235
      %v242 = vrcp.pop %v237
      %v243 = vrcp.pop %v239
      %v244 = vmul.f32 %v225, %v240
      %v245 = vmul.f32 %v227, %v241
      %v246 = vmul.f32 %v229, %v242
      %v247 = vmul.f32 %v231, %v243
      %v248 = vpack.c.bf16 %v245, %v244
      %v249 = vpack.c.bf16 %v247, %v246
      %250 = vmatpush.bf16.msra.mxu0 %v165
      %251 = vmatpush.bf16.msra.mxu0 %v164
      %252 = vmatpush.bf16.msra.mxu0 %v163
      %253 = vmatpush.bf16.msra.mxu0 %v162
      %254 = vmatpush.bf16.msra.mxu0 %v161
      %255 = vmatpush.bf16.msra.mxu0 %v160
      %256 = vmatpush.bf16.msra.mxu0 %v159
      %257 = vmatpush.bf16.msra.mxu0 %v158
      %258 = vmatmul.bf16.gmra.mxu0 %v248
      %v259 = vpop.f32.mrf.mxu0
      %v260 = vadd.f32 0.0, %v259
      %v261 = vpop.f32.mrf.mxu0
      %v262 = vadd.f32 0.0, %v261
      %263 = vmatmul.bf16.gmra.mxu0 %v249
      %v264 = vpop.f32.mrf.mxu0
      %v265 = vadd.f32 0.0, %v264
      %v266 = vpop.f32.mrf.mxu0
      %v267 = vadd.f32 0.0, %v266
      %268 = vdwg.mxu0
      %v269 = vunpack.c.l.bf16 %v94
      %v270 = vunpack.c.l.bf16 %v95
      %v271 = vunpack.c.l.bf16 %v96
      %v272 = vunpack.c.l.bf16 %v97
      %v273 = vadd.f32 %v269, %v260
      %v274 = vadd.f32 %v270, %v262
      %v275 = vadd.f32 %v271, %v265
      %v276 = vadd.f32 %v272, %v267
      %v277 = vpack.c.bf16 %v273, %v273
      %v278 = vpack.c.bf16 %v274, %v274
      %v279 = vpack.c.bf16 %v275, %v275
      %v280 = vpack.c.bf16 %v276, %v276
      %281 = vst [vmem:[#allocation2] sm:$0xf] %v277
      %282 = vst [vmem:[#allocation2 + $0x4] sm:$0xf] %v278
      %283 = vst [vmem:[#allocation2 + $0x8] sm:$0xf] %v279
      %284 = vst [vmem:[#allocation2 + $0xc] sm:$0xf] %v280
      %v285 = vunpack.c.l.bf16 %v277
      %v286 = vunpack.c.l.bf16 %v278
      %v287 = vunpack.c.l.bf16 %v279
      %v288 = vunpack.c.l.bf16 %v280
      %v289 = vld [vmem:[#allocation10] sm:$0xf]
      %v290 = vld [vmem:[#allocation10 + $0x4] sm:$0xf]
      %v291 = vld [vmem:[#allocation10 + $0x8] sm:$0xf]
      %v292 = vld [vmem:[#allocation10 + $0xc] sm:$0xf]
      %v293 = vunpack.c.l.bf16 %v289
      %v294 = vunpack.c.l.bf16 %v290
      %v295 = vunpack.c.l.bf16 %v291
      %v296 = vunpack.c.l.bf16 %v292
      %v297 = vmul.f32 %v285, %v293
      %v298 = vmul.f32 %v286, %v294
      %v299 = vmul.f32 %v287, %v295
      %v300 = vmul.f32 %v288, %v296
      %301 = vadd.xlane.f32.xlu0 %v297
      %v302 = vpop.xlane.xlu0 %301
      %303 = vadd.xlane.f32.xlu0 %v298
      %v304 = vpop.xlane.xlu0 %303
      %305 = vadd.xlane.f32.xlu0 %v299
      %v306 = vpop.xlane.xlu0 %305
      %307 = vadd.xlane.f32.xlu0 %v300
      %v308 = vpop.xlane.xlu0 %307
      %v309 = vld [vmem:[%s4] sm:$0xff]
      %v310 = vld [vmem:[%s4 + $0x8] sm:$0xff]
      %v311 = vld [vmem:[%s4 + $0x10] sm:$0xff]
      %v312 = vld [vmem:[%s4 + $0x18] sm:$0xff]
      %v313 = vadd.f32 %v302, %v309
      %v314 = vadd.f32 %v304, %v310
      %v315 = vadd.f32 %v306, %v311
      %v316 = vadd.f32 %v308, %v312
      %vm317 = vcmask 7168
      %318 = vst.msk [vmem:[#allocation5] sm:$0xff] %vm317, %v313
      %319 = vst.msk [vmem:[#allocation5 + $0x8] sm:$0xff] %vm317, %v314
      %320 = vst.msk [vmem:[#allocation5 + $0x10] sm:$0xff] %vm317, %v315
      %321 = vst.msk [vmem:[#allocation5 + $0x18] sm:$0xff] %vm317, %v316
      %322 = vst.msk [vmem:[#allocation3] sm:$0xff] %vm317, -inf
      %323 = vst.msk [vmem:[#allocation3 + $0x8] sm:$0xff] %vm317, -inf
      %324 = vst.msk [vmem:[#allocation3 + $0x10] sm:$0xff] %vm317, -inf
      %325 = vst.msk [vmem:[#allocation3 + $0x18] sm:$0xff] %vm317, -inf
      %326 = vst.msk [vmem:[#allocation4] sm:$0xff] %vm317, 0.0
      %327 = vst.msk [vmem:[#allocation4 + $0x8] sm:$0xff] %vm317, 0.0
      %328 = vst.msk [vmem:[#allocation4 + $0x10] sm:$0xff] %vm317, 0.0
      %329 = vst.msk [vmem:[#allocation4 + $0x18] sm:$0xff] %vm317, 0.0
    $region53: #{tpu_custom_call.1} parent=1 // pred_fallthru
      _
    %v330 = vld [vmem:[#allocation2] sm:$0xf]
    %v331 = vld [vmem:[#allocation2 + $0x4] sm:$0xf]
    %v332 = vld [vmem:[#allocation2 + $0x8] sm:$0xf]
    %v333 = vld [vmem:[#allocation2 + $0xc] sm:$0xf]
    %v334 = vld [vmem:[#allocation11] sm:$0xff]
    %v335 = vld [vmem:[#allocation11 + $0x8] sm:$0xff]
    %v336 = vld [vmem:[#allocation11 + $0x10] sm:$0xff]
    %v337 = vld [vmem:[#allocation11 + $0x18] sm:$0xff]
    %v338 = vld [vmem:[#allocation11 + $0x20] sm:$0xff]
    %v339 = vld [vmem:[#allocation11 + $0x28] sm:$0xff]
    %v340 = vld [vmem:[#allocation11 + $0x30] sm:$0xff]
    %v341 = vld [vmem:[#allocation11 + $0x38] sm:$0xff]
    %v342 = vld [vmem:[#allocation11 + $0x40] sm:$0xff]
    %v343 = vld [vmem:[#allocation11 + $0x48] sm:$0xff]
    %v344 = vld [vmem:[#allocation11 + $0x50] sm:$0xff]
    %v345 = vld [vmem:[#allocation11 + $0x58] sm:$0xff]
    %v346 = vld [vmem:[#allocation11 + $0x60] sm:$0xff]
    %v347 = vld [vmem:[#allocation11 + $0x68] sm:$0xff]
    %v348 = vld [vmem:[#allocation11 + $0x70] sm:$0xff]
    %v349 = vld [vmem:[#allocation11 + $0x78] sm:$0xff]
    %v350 = vld [vmem:[%s7] sm:$0x3]
    %v352 = vperm.slane %v350, 0
    %v353 = vperm.slane %v350, 1
    %v360 = vunpack.c.l.b16 %v330
    %v361 = vunpack.c.l.b16 %v331
    %v362 = vunpack.c.l.b16 %v332
    %v363 = vunpack.c.l.b16 %v333
    %v364 = vpack.c.b16 %v361, %v360
    %v365 = vpack.c.b16 %v363, %v362
    %v384 = vunpack.c.l.b16 %v334
    %v385 = vunpack.c.h.b16 %v334
    %v386 = vunpack.c.l.b16 %v335
    %v387 = vunpack.c.h.b16 %v335
    %v388 = vunpack.c.l.b16 %v336
    %v389 = vunpack.c.h.b16 %v336
    %v390 = vunpack.c.l.b16 %v337
    %v391 = vunpack.c.h.b16 %v337
    %v392 = vunpack.c.l.b16 %v338
    %v393 = vunpack.c.h.b16 %v338
    %v394 = vunpack.c.l.b16 %v339
    %v395 = vunpack.c.h.b16 %v339
    %v396 = vunpack.c.l.b16 %v340
    %v397 = vunpack.c.h.b16 %v340
    %v398 = vunpack.c.l.b16 %v341
    %v399 = vunpack.c.h.b16 %v341
    %v400 = vunpack.c.l.b16 %v342
    %v401 = vunpack.c.h.b16 %v342
    %v402 = vunpack.c.l.b16 %v343
    %v403 = vunpack.c.h.b16 %v343
    %v404 = vunpack.c.l.b16 %v344
    %v405 = vunpack.c.h.b16 %v344
    %v406 = vunpack.c.l.b16 %v345
    %v407 = vunpack.c.h.b16 %v345
    %v408 = vunpack.c.l.b16 %v346
    %v409 = vunpack.c.h.b16 %v346
    %v410 = vunpack.c.l.b16 %v347
    %v411 = vunpack.c.h.b16 %v347
    %v412 = vunpack.c.l.b16 %v348
    %v413 = vunpack.c.h.b16 %v348
    %v414 = vunpack.c.l.b16 %v349
    %v415 = vunpack.c.h.b16 %v349
    %v416 = vpack.c.b16 %v386, %v384
    %v417 = vpack.c.b16 %v387, %v385
    %v418 = vpack.c.b16 %v390, %v388
    %v419 = vpack.c.b16 %v391, %v389
    %v420 = vpack.c.b16 %v394, %v392
    %v421 = vpack.c.b16 %v395, %v393
    %v422 = vpack.c.b16 %v398, %v396
    %v423 = vpack.c.b16 %v399, %v397
    %v424 = vpack.c.b16 %v402, %v400
    %v425 = vpack.c.b16 %v403, %v401
    %v426 = vpack.c.b16 %v406, %v404
    %v427 = vpack.c.b16 %v407, %v405
    %v428 = vpack.c.b16 %v410, %v408
    %v429 = vpack.c.b16 %v411, %v409
    %v430 = vpack.c.b16 %v414, %v412
    %v431 = vpack.c.b16 %v415, %v413
    %448 = vmatpush.bf16.msra.mxu0 %v430
    %449 = vmatpush.bf16.msra.mxu0 %v428
    %450 = vmatpush.bf16.msra.mxu0 %v426
    %451 = vmatpush.bf16.msra.mxu0 %v424
    %452 = vmatpush.bf16.msra.mxu0 %v422
    %453 = vmatpush.bf16.msra.mxu0 %v420
    %454 = vmatpush.bf16.msra.mxu0 %v418
    %455 = vmatpush.bf16.msra.mxu0 %v416
    %456 = vmatmul.bf16.gmra.mxu0 %v364
    %v457 = vpop.f32.mrf.mxu0
    %v458 = vadd.f32 %v352, %v457
    %v459 = vpop.f32.mrf.mxu0
    %v460 = vadd.f32 %v352, %v459
    %461 = vmatmul.bf16.gmra.mxu0 %v365
    %v462 = vpop.f32.mrf.mxu0
    %v463 = vadd.f32 %v352, %v462
    %v464 = vpop.f32.mrf.mxu0
    %v465 = vadd.f32 %v352, %v464
    %466 = vdwg.mxu0
    %467 = vmatpush.bf16.msra.mxu0 %v431
    %468 = vmatpush.bf16.msra.mxu0 %v429
    %469 = vmatpush.bf16.msra.mxu0 %v427
    %470 = vmatpush.bf16.msra.mxu0 %v425
    %471 = vmatpush.bf16.msra.mxu0 %v423
    %472 = vmatpush.bf16.msra.mxu0 %v421
    %473 = vmatpush.bf16.msra.mxu0 %v419
    %474 = vmatpush.bf16.msra.mxu0 %v417
    %475 = vmatmul.bf16.gmra.mxu0 %v364
    %v476 = vpop.f32.mrf.mxu0
    %v477 = vadd.f32 %v353, %v476
    %v478 = vpop.f32.mrf.mxu0
    %v479 = vadd.f32 %v353, %v478
    %480 = vmatmul.bf16.gmra.mxu0 %v365
    %v481 = vpop.f32.mrf.mxu0
    %v482 = vadd.f32 %v353, %v481
    %v483 = vpop.f32.mrf.mxu0
    %v484 = vadd.f32 %v353, %v483
    %485 = vdwg.mxu0
    %v486 = vld [vmem:[#allocation3] sm:$0xff]
    %v487 = vld [vmem:[#allocation3 + $0x8] sm:$0xff]
    %v488 = vld [vmem:[#allocation3 + $0x10] sm:$0xff]
    %v489 = vld [vmem:[#allocation3 + $0x18] sm:$0xff]
    %v490 = vmax.f32 %v458, %v477
    %491 = vmax.xlane.f32.xlu0 %v490
    %v492 = vpop.xlane.xlu0 %491
    %v493 = vmax.f32 %v460, %v479
    %494 = vmax.xlane.f32.xlu0 %v493
    %v495 = vpop.xlane.xlu0 %494
    %v496 = vmax.f32 %v463, %v482
    %497 = vmax.xlane.f32.xlu0 %v496
    %v498 = vpop.xlane.xlu0 %497
    %v499 = vmax.f32 %v465, %v484
    %500 = vmax.xlane.f32.xlu0 %v499
    %v501 = vpop.xlane.xlu0 %500
    %v502 = vmax.f32 %v486, %v492
    %v503 = vmax.f32 %v487, %v495
    %v504 = vmax.f32 %v488, %v498
    %v505 = vmax.f32 %v489, %v501
    %v506 = vld [vmem:[#allocation4] sm:$0xff]
    %v507 = vld [vmem:[#allocation4 + $0x8] sm:$0xff]
    %v508 = vld [vmem:[#allocation4 + $0x10] sm:$0xff]
    %v509 = vld [vmem:[#allocation4 + $0x18] sm:$0xff]
    %v510 = vsub.f32 %v486, %v502
    %v511 = vsub.f32 %v487, %v503
    %v512 = vsub.f32 %v488, %v504
    %v513 = vsub.f32 %v489, %v505
    %v514 = vmul.f32 %v510, 1.442695
    %v515 = vpow.pop %v514
    %v516 = vmul.f32 %v511, 1.442695
    %v517 = vpow.pop %v516
    %v518 = vmul.f32 %v512, 1.442695
    %v519 = vpow.pop %v518
    %v520 = vmul.f32 %v513, 1.442695
    %v521 = vpow.pop %v520
    %v522 = vmul.f32 %v506, %v515
    %v523 = vmul.f32 %v507, %v517
    %v524 = vmul.f32 %v508, %v519
    %v525 = vmul.f32 %v509, %v521
    %527 = vset.pattern.permute.xlu0 0
    %528 = vperm.xlu0 %527, %v502
    %v529 = vpop.permute.xlu0 %528
    %532 = vset.pattern.permute.xlu0 0
    %533 = vperm.xlu0 %532, %v503
    %v534 = vpop.permute.xlu0 %533
    %537 = vset.pattern.permute.xlu0 0
    %538 = vperm.xlu0 %537, %v504
    %v539 = vpop.permute.xlu0 %538
    %542 = vset.pattern.permute.xlu0 0
    %543 = vperm.xlu0 %542, %v505
    %v544 = vpop.permute.xlu0 %543
    %v546 = vsub.f32 %v458, %v529
    %v547 = vsub.f32 %v477, %v529
    %v548 = vsub.f32 %v460, %v534
    %v549 = vsub.f32 %v479, %v534
    %v550 = vsub.f32 %v463, %v539
    %v551 = vsub.f32 %v482, %v539
    %v552 = vsub.f32 %v465, %v544
    %v553 = vsub.f32 %v484, %v544
    %v554 = vmul.f32 %v546, 1.442695
    %v555 = vpow.pop %v554
    %v556 = vmul.f32 %v547, 1.442695
    %v557 = vpow.pop %v556
    %v558 = vmul.f32 %v548, 1.442695
    %v559 = vpow.pop %v558
    %v560 = vmul.f32 %v549, 1.442695
    %v561 = vpow.pop %v560
    %v562 = vmul.f32 %v550, 1.442695
    %v563 = vpow.pop %v562
    %v564 = vmul.f32 %v551, 1.442695
    %v565 = vpow.pop %v564
    %v566 = vmul.f32 %v552, 1.442695
    %v567 = vpow.pop %v566
    %v568 = vmul.f32 %v553, 1.442695
    %v569 = vpow.pop %v568
    %v570 = vadd.f32 %v555, %v557
    %571 = vadd.xlane.f32.xlu0 %v570
    %v572 = vpop.xlane.xlu0 %571
    %v573 = vadd.f32 %v559, %v561
    %574 = vadd.xlane.f32.xlu0 %v573
    %v575 = vpop.xlane.xlu0 %574
    %v576 = vadd.f32 %v563, %v565
    %577 = vadd.xlane.f32.xlu0 %v576
    %v578 = vpop.xlane.xlu0 %577
    %v579 = vadd.f32 %v567, %v569
    %580 = vadd.xlane.f32.xlu0 %v579
    %v581 = vpop.xlane.xlu0 %580
    %v582 = vadd.f32 %v522, %v572
    %v583 = vadd.f32 %v523, %v575
    %v584 = vadd.f32 %v524, %v578
    %v585 = vadd.f32 %v525, %v581
    %vm586 = vcmask 7168
    %587 = vst.msk [vmem:[#allocation4] sm:$0xff] %vm586, %v582
    %588 = vst.msk [vmem:[#allocation4 + $0x8] sm:$0xff] %vm586, %v583
    %589 = vst.msk [vmem:[#allocation4 + $0x10] sm:$0xff] %vm586, %v584
    %590 = vst.msk [vmem:[#allocation4 + $0x18] sm:$0xff] %vm586, %v585
    %591 = vst.msk [vmem:[#allocation3] sm:$0xff] %vm586, %v502
    %592 = vst.msk [vmem:[#allocation3 + $0x8] sm:$0xff] %vm586, %v503
    %593 = vst.msk [vmem:[#allocation3 + $0x10] sm:$0xff] %vm586, %v504
    %594 = vst.msk [vmem:[#allocation3 + $0x18] sm:$0xff] %vm586, %v505
    // Predicated region
    $region54: #{tpu_custom_call.1} parent=1 // pred_check
      %p595 = pneg %p90
    $region55: #{tpu_custom_call.1} parent=1 // pred_check_branch
      %597 = sbr.rel (%p595) target = $region57
    $region56: #{tpu_custom_call.1} parent=1 // pred_region
      %v598 = vld [vmem:[#allocation3] sm:$0xff]
      %v599 = vld [vmem:[#allocation3 + $0x8] sm:$0xff]
      %v600 = vld [vmem:[#allocation3 + $0x10] sm:$0xff]
      %v601 = vld [vmem:[#allocation3 + $0x18] sm:$0xff]
      %v602 = vld [vmem:[#allocation4] sm:$0xff]
      %v603 = vld [vmem:[#allocation4 + $0x8] sm:$0xff]
      %v604 = vld [vmem:[#allocation4 + $0x10] sm:$0xff]
      %v605 = vld [vmem:[#allocation4 + $0x18] sm:$0xff]
      %v606 = vlog2.pop %v602
      %v607 = vmul.f32 %v606, 0.6931472
      %v608 = vlog2.pop %v603
      %v609 = vmul.f32 %v608, 0.6931472
      %v610 = vlog2.pop %v604
      %v611 = vmul.f32 %v610, 0.6931472
      %v612 = vlog2.pop %v605
      %v613 = vmul.f32 %v612, 0.6931472
      %v614 = vadd.f32 %v598, %v607
      %v615 = vadd.f32 %v599, %v609
      %v616 = vadd.f32 %v600, %v611
      %v617 = vadd.f32 %v601, %v613
      %v618 = vld [vmem:[#allocation5] sm:$0xff]
      %v619 = vld [vmem:[#allocation5 + $0x8] sm:$0xff]
      %v620 = vld [vmem:[#allocation5 + $0x10] sm:$0xff]
      %v621 = vld [vmem:[#allocation5 + $0x18] sm:$0xff]
      %v622 = vsub.f32 %v614, %v618
      %v623 = vsub.f32 %v615, %v619
      %v624 = vsub.f32 %v616, %v620
      %v625 = vsub.f32 %v617, %v621
      %v626 = vld [vmem:[%s2] sm:$0xff]
      %v627 = vld [vmem:[%s2 + $0x8] sm:$0xff]
      %v628 = vld [vmem:[%s2 + $0x10] sm:$0xff]
      %v629 = vld [vmem:[%s2 + $0x18] sm:$0xff]
      %v630 = vmul.f32 %v622, %v626
      %v631 = vmul.f32 %v623, %v627
      %v632 = vmul.f32 %v624, %v628
      %v633 = vmul.f32 %v625, %v629
      %v634 = vsel %vm586, %v630, 0.0
      %v635 = vrot.slane %v634, 4
      %v636 = vadd.f32 %v634, %v635
      %v637 = vrot.slane %v636, 2
      %v638 = vadd.f32 %v636, %v637
      %v639 = vrot.slane %v638, 1
      %v640 = vadd.f32 %v638, %v639
      %v641 = vsel %vm586, %v631, 0.0
      %v642 = vrot.slane %v641, 4
      %v643 = vadd.f32 %v641, %v642
      %v644 = vrot.slane %v643, 2
      %v645 = vadd.f32 %v643, %v644
      %v646 = vrot.slane %v645, 1
      %v647 = vadd.f32 %v645, %v646
      %v648 = vsel %vm586, %v632, 0.0
      %v649 = vrot.slane %v648, 4
      %v650 = vadd.f32 %v648, %v649
      %v651 = vrot.slane %v650, 2
      %v652 = vadd.f32 %v650, %v651
      %v653 = vrot.slane %v652, 1
      %v654 = vadd.f32 %v652, %v653
      %v655 = vsel %vm586, %v633, 0.0
      %v656 = vrot.slane %v655, 4
      %v657 = vadd.f32 %v655, %v656
      %v658 = vrot.slane %v657, 2
      %v659 = vadd.f32 %v657, %v658
      %v660 = vrot.slane %v659, 1
      %v661 = vadd.f32 %v659, %v660
      %v662 = vmul.f32 %v640, 0.125
      %v663 = vmul.f32 %v647, 0.125
      %v664 = vmul.f32 %v654, 0.125
      %v665 = vmul.f32 %v661, 0.125
      %vm670 = vcmask 1041409
      %v671 = vsel %vm670, %v663, %v662
      %vm672 = vcmask 1042434
      %v673 = vsel %vm672, %v664, %v671
      %vm674 = vcmask 1043459
      %v675 = vsel %vm674, %v665, %v673
      %vm677 = vcmask 3072
      %678 = vst.msk [vmem:[%s8] sm:$0xf] %vm677, %v675
    $region57: #{tpu_custom_call.1} parent=1 // pred_fallthru
      _
    // Predicated region
    $region58: #{tpu_custom_call.1} parent=1 // pred_check
      _
    $region59: #{tpu_custom_call.1} parent=1 // pred_check_branch
      %680 = sbr.rel (0) target = $region61
    $region60: #{tpu_custom_call.1} parent=1 // pred_region
      _
    $region61: #{tpu_custom_call.1} parent=1 // pred_fallthru
      _
    // Predicated region
    $region62: #{tpu_custom_call.1} parent=1 // pred_check
      _
    $region63: #{tpu_custom_call.1} parent=1 // pred_check_branch
      %682 = sbr.rel (0) target = $region65
    $region64: #{tpu_custom_call.1} parent=1 // pred_region
      _
    $region65: #{tpu_custom_call.1} parent=1 // pred_fallthru
      _
    %683 = vsyncpa [#allocation7], 1
    %684 = vsyncpa [#allocation9], 1
    %685 = vsyncpa [#allocation12], 1

</llo_original>
